<compile_context>
chip_gen: v5e
topology: v5e:2x2
jax: 0.10.0
libtpu: 0.0.40
codegen_flags: <defaults>
</compile_context>

<pallas_src>
import functools
import math

import jax
import jax.numpy as jnp
from jax import lax
from jax.experimental import pallas as pl
from jax.experimental.pallas import tpu as pltpu


_MASK_VALUE = -0.7 * float(jnp.finfo(jnp.float32).max)   # finite, never -inf


def _round_up(x, m):
    return (x + m - 1) // m * m


def _vmem_limit(per_step_bytes):
    # Generation-aware cap: ~3/4 of physical VMEM (≈96 MiB on v5e/v6e,
    # ≈48 MiB on v7x); conservative 48 MiB fallback if the query fails.
    cap = 48 * 1024 * 1024
    try:
        info = pltpu.get_tpu_info()
        phys = getattr(info, "vmem_capacity_bytes", None)
        if phys:
            cap = int(phys) * 3 // 4
    except Exception:
        pass
    return int(min(max(2 * per_step_bytes, 32 * 1024 * 1024), cap))


# ---------------------------------------------------------------------------
# Kernel 1: fused QKV projection over head groups.
# grid = (B, n_seq_tiles, n_head_groups); one (t, D) x (D, G*3*hd) matmul/step.
# ---------------------------------------------------------------------------
def _qkv_proj_kernel(x_ref, w_ref, b_ref, q_ref, k_ref, v_ref, *,
                     weights_resident, group_heads, head_dim, scale):
    grp = pl.program_id(2)
    x = x_ref[0]                                            # (t, D)
    # Resident stacked weight: dynamic major-axis index, no HBM re-fetch.
    w = w_ref[grp] if weights_resident else w_ref[0]        # (D, G*3*hd)
    b = b_ref[grp]                                          # (1, G*3*hd)

    y = jnp.dot(x, w, preferred_element_type=jnp.float32) + b   # (t, G*3*hd)

    hd = head_dim
    for g in range(group_heads):                            # static unroll
        base = g * 3 * hd
        # Fold 1/sqrt(hd) into q once (cheaper than scaling score tiles later).
        q_ref[0, g] = (y[:, base:base + hd] * scale).astype(q_ref.dtype)
        k_ref[0, g] = y[:, base + hd:base + 2 * hd].astype(k_ref.dtype)
        v_ref[0, g] = y[:, base + 2 * hd:base + 3 * hd].astype(v_ref.dtype)


# ---------------------------------------------------------------------------
# Kernel 2: flash attention (all heads per step) + fused output projection.
# grid = (B, n_q_tiles, n_kv_tiles); kv is the reduction ("arbitrary") axis.
# ---------------------------------------------------------------------------
def _flash_attn_proj_kernel(q_ref, k_ref, v_ref, wp_ref, bp_ref, o_ref,
                            m_sc, l_sc, acc_sc, *,
                            n_head, tq, tk, l_valid, causal, pad,
                            compute_dtype):
    qi = pl.program_id(1)
    ki = pl.program_id(2)
    n_k = pl.num_programs(2)
    q_start = qi * tq
    k_start = ki * tk

    @pl.when(ki == 0)
    def _init():
        m_sc[...] = jnp.full_like(m_sc, -jnp.inf)
        l_sc[...] = jnp.zeros_like(l_sc)
        acc_sc[...] = jnp.zeros_like(acc_sc)

    def _step(masked):
        if masked:
            row = q_start + lax.broadcasted_iota(jnp.int32, (tq, tk), 0)
            col = k_start + lax.broadcasted_iota(jnp.int32, (tq, tk), 1)
            valid = None
            if pad:
                valid = col < l_valid            # mask padded kv positions
            if causal:
                c = row >= col
                valid = c if valid is None else jnp.logical_and(valid, c)
        for h in range(n_head):                  # static head loop
            q = q_ref[0, h]                      # (tq, hd)
            k = k_ref[0, h]                      # (tk, hd)
            v = v_ref[0, h]                      # (tk, hd)
            # q @ k^T without an explicit transpose (contract last dims).
            s = lax.dot_general(q, k, (((1,), (1,)), ((), ())),
                                preferred_element_type=jnp.float32)
            if masked:
                s = jnp.where(valid, s, _MASK_VALUE)
            m_prev = m_sc[h]
            m_new = jnp.maximum(m_prev, jnp.max(s, axis=-1, keepdims=True))
            alpha = jnp.exp(m_prev - m_new)
            p = jnp.exp(s - m_new)               # f32
            l_sc[h] = alpha * l_sc[h] + jnp.sum(p, axis=-1, keepdims=True)
            acc_sc[h] = alpha * acc_sc[h] + jnp.dot(
                p.astype(compute_dtype), v, preferred_element_type=jnp.float32)
            m_sc[h] = m_new

    # Boundary-only masking: interior tiles take the unmasked path.
    if causal or pad:
        conds = []
        if causal:
            conds.append(k_start + (tk - 1) > q_start)   # straddles diagonal
        if pad:
            conds.append(ki == n_k - 1)                  # contains padded cols
        boundary = conds[0] if len(conds) == 1 else jnp.logical_or(*conds)
        if causal:
            # Skip kv tiles fully above the diagonal (compute only; the DMA is
            # skipped by the clamped index_map in the wrapper).
            do = k_start <= q_start + (tq - 1)

            @pl.when(jnp.logical_and(do, boundary))
            def _masked_step():
                _step(True)

            @pl.when(jnp.logical_and(do, jnp.logical_not(boundary)))
            def _plain_step():
                _step(False)
        else:
            @pl.when(boundary)
            def _masked_step():
                _step(True)

            @pl.when(jnp.logical_not(boundary))
            def _plain_step():
                _step(False)
    else:
        _step(False)

    if causal:
        last_k = jnp.minimum(((qi + 1) * tq - 1) // tk, n_k - 1)
    else:
        last_k = n_k - 1

    @pl.when(ki == last_k)
    def _finish():
        approx = compute_dtype != jnp.dtype(jnp.float32)
        ys = []
        for h in range(n_head):
            inv_l = pl.reciprocal(l_sc[h], approx=approx)       # EUP slot
            ys.append((acc_sc[h] * inv_l).astype(compute_dtype))
        y = ys[0] if n_head == 1 else jnp.concatenate(ys, axis=-1)  # (tq, D)
        # Single full-width projection (K = D) with W_proj VMEM-resident.
        out = jnp.dot(y, wp_ref[...],
                      preferred_element_type=jnp.float32) + bp_ref[...]
        o_ref[0] = out.astype(o_ref.dtype)


# ---------------------------------------------------------------------------
# Wrapper
# ---------------------------------------------------------------------------
def multi_head_self_attention(x, params, *, n_head, right_masking=False,
                              compute_dtype=jnp.bfloat16,
                              q_tile=256, kv_tile=512):
    """x: (B, L, D) float32.  params: W_attn (D,3D), b_attn (3D,), W_proj (D,D),
    b_proj (D,).  Matches PyTorch MultiHeadSelfAttention.forward at eval."""
    B, L, D = x.shape
    H = n_head
    assert D % H == 0, "embedding size must be divisible by n_head"
    hd = D // H
    scale = 1.0 / math.sqrt(hd)
    compute_dtype = jnp.dtype(compute_dtype)
    cdb = compute_dtype.itemsize
    causal = bool(right_masking)

    # ---- tiling: larger KV tiles than Q tiles to amortize per-step overhead.
    base = _round_up(L, 8)
    tq = min(q_tile, base)
    tk = min(kv_tile, base)
    if tk % tq != 0:
        tk = tq
    Lp = _round_up(L, tk)            # multiple of tk (hence of tq)
    n_q = Lp // tq
    n_kv = Lp // tk
    pad = Lp != L

    xp = x if Lp == L else jnp.pad(x, ((0, 0), (0, Lp - L), (0, 0)))
    xp = xp.astype(compute_dtype)

    # ---- head grouping for kernel 1: smallest divisor G of H with
    #      G*3*hd >= 256 (full MXU columns on v6e/v7x), else all heads.
    G = H
    for g in range(1, H + 1):
        if H % g == 0 and g * 3 * hd >= 256:
            G = g
            break
    n_grp = H // G
    n3 = G * 3 * hd

    # One-time host-side layout plumbing: stacked per-group QKV weights with
    # column order [head-in-group][q|k|v][hd].
    Wa = params["W_attn"].reshape(D, 3, H, hd)
    Wg = jnp.transpose(Wa, (2, 0, 1, 3))                    # (H, D, 3, hd)
    Wg = Wg.reshape(n_grp, G, D, 3 * hd)
    Wg = jnp.transpose(Wg, (0, 2, 1, 3)).reshape(n_grp, D, n3)
    Wg = Wg.astype(compute_dtype)
    ba = params["b_attn"].reshape(3, H, hd)
    bg = jnp.transpose(ba, (1, 0, 2)).reshape(n_grp, 1, n3).astype(jnp.float32)
    Wp = params["W_proj"].astype(compute_dtype)             # (D, D) resident
    bp = params["b_proj"].reshape(1, D).astype(jnp.float32)

    # ---- kernel 1: QKV projection ------------------------------------------
    t1 = tq
    n_t1 = Lp // t1
    w_bytes = n_grp * D * n3 * cdb                          # == 3*D*D*cdb
    weights_resident = w_bytes <= 8 * 1024 * 1024
    if weights_resident:
        # Constant index_map: the full stacked weight stays in VMEM for the
        # whole call (no per-step re-DMA); the kernel indexes w_ref[group].
        w_spec = pl.BlockSpec((n_grp, D, n3), lambda b, li, g: (0, 0, 0))
        w_buf_bytes = 2 * w_bytes
    else:
        # TODO(synk): very large D falls back to per-group weight blocks
        # (re-fetched when the group changes); tile D for a better scheme.
        w_spec = pl.BlockSpec((1, D, n3), lambda b, li, g: (g, 0, 0))
        w_buf_bytes = 2 * D * n3 * cdb

    hd_pad = _round_up(hd, 128)      # VMEM lane padding of (.., hd) tiles
    est1 = (2 * t1 * D * cdb + w_buf_bytes + n_grp * n3 * 4
            + 2 * 3 * G * t1 * hd_pad * cdb + t1 * n3 * 4)

    qkv_shape = jax.ShapeDtypeStruct((B, H, Lp, hd), compute_dtype)
    q, k, v = pl.pallas_call(
        functools.partial(_qkv_proj_kernel, weights_resident=weights_resident,
                          group_heads=G, head_dim=hd, scale=scale),
        out_shape=(qkv_shape, qkv_shape, qkv_shape),
        grid_spec=pltpu.PrefetchScalarGridSpec(
            num_scalar_prefetch=0,
            grid=(B, n_t1, n_grp),
            in_specs=[
                pl.BlockSpec((1, t1, D), lambda b, li, g: (b, li, 0)),    # x
                w_spec,                                                   # Wqkv
                pl.BlockSpec((n_grp, 1, n3), lambda b, li, g: (0, 0, 0)), # bias
            ],
            out_specs=[
                pl.BlockSpec((1, G, t1, hd), lambda b, li, g: (b, g, li, 0)),
                pl.BlockSpec((1, G, t1, hd), lambda b, li, g: (b, g, li, 0)),
                pl.BlockSpec((1, G, t1, hd), lambda b, li, g: (b, g, li, 0)),
            ],
        ),
        compiler_params=pltpu.CompilerParams(
            dimension_semantics=("parallel", "parallel", "parallel"),
            vmem_limit_bytes=_vmem_limit(est1),
        ),
    )(xp, Wg, bg)

    # ---- kernel 2: flash attention + fused output projection ----------------
    if causal:
        # Clamp the kv block index to the last needed tile so fully-skipped
        # causal tiles also skip the K/V DMA (block index repeats => no copy).
        def kv_map(b, qi, ki):
            last = ((qi + 1) * tq - 1) // tk
            return (b, 0, jnp.minimum(ki, last), 0)
    else:
        def kv_map(b, qi, ki):
            return (b, 0, ki, 0)

    est2 = (2 * H * tq * hd_pad * cdb          # q (double-buffered)
            + 4 * H * tk * hd_pad * cdb        # k + v
            + 2 * D * D * cdb                  # W_proj resident
            + 2 * tq * D * 4                   # output block (f32)
            + H * tq * hd_pad * 4              # acc scratch
            + 2 * H * tq * 128 * 4             # m, l scratch (lane-padded)
            + 2 * tq * D * 4)                  # projection temporaries

    kern = functools.partial(
        _flash_attn_proj_kernel, n_head=H, tq=tq, tk=tk, l_valid=L,
        causal=causal, pad=pad, compute_dtype=compute_dtype)

    out = pl.pallas_call(
        kern,
        out_shape=jax.ShapeDtypeStruct((B, Lp, D), x.dtype),
        grid_spec=pltpu.PrefetchScalarGridSpec(
            num_scalar_prefetch=0,
            grid=(B, n_q, n_kv),
            in_specs=[
                pl.BlockSpec((1, H, tq, hd), lambda b, qi, ki: (b, 0, qi, 0)),
                pl.BlockSpec((1, H, tk, hd), kv_map),
                pl.BlockSpec((1, H, tk, hd), kv_map),
                pl.BlockSpec((D, D), lambda b, qi, ki: (0, 0)),   # W_proj
                pl.BlockSpec((1, D), lambda b, qi, ki: (0, 0)),   # b_proj
            ],
            out_specs=pl.BlockSpec((1, tq, D), lambda b, qi, ki: (b, qi, 0)),
            scratch_shapes=[
                pltpu.VMEM((H, tq, 1), jnp.float32),    # running max
                pltpu.VMEM((H, tq, 1), jnp.float32),    # running denom
                pltpu.VMEM((H, tq, hd), jnp.float32),   # per-head accumulator
            ],
        ),
        compiler_params=pltpu.CompilerParams(
            dimension_semantics=("parallel", "parallel", "arbitrary"),
            vmem_limit_bytes=_vmem_limit(est2),
        ),
    )(q, k, v, Wp, bp)

    if pad:
        out = out[:, :L, :]
    return out


# ---------------------------------------------------------------------------
# Pure-JAX reference mirroring the PyTorch forward exactly.
# ---------------------------------------------------------------------------
def _reference(x, params, *, n_head, right_masking=False):
    B, L, D = x.shape
    hd = D // n_head
    qkv = x @ params["W_attn"] + params["b_attn"]
    q, k, v = jnp.split(qkv, 3, axis=-1)

    def heads(a):
        return a.reshape(B, L, n_head, hd).transpose(0, 2, 1, 3)

    q, k, v = heads(q), heads(k), heads(v)
    att = jnp.einsum("bhqd,bhkd->bhqk", q, k) / math.sqrt(hd)
    if right_masking:
        mask = jnp.tril(jnp.ones((L, L), bool))
        att = jnp.where(mask[None, None], att, -jnp.inf)
    att = jax.nn.softmax(att, axis=-1)
    y = jnp.einsum("bhqk,bhkd->bhqd", att, v)
    y = y.transpose(0, 2, 1, 3).reshape(B, L, D)
    return y @ params["W_proj"] + params["b_proj"]


if __name__ == "__main__":
    B, L, D, H = 2, 8, 32, 4
    key = jax.random.PRNGKey(0)
    kx, k1, k2, k3, k4 = jax.random.split(key, 5)

    x = jax.random.normal(kx, (B, L, D), dtype=jnp.float32)
    params = {
        "W_attn": 0.02 * jax.random.normal(k1, (D, 3 * D), dtype=jnp.float32),
        "b_attn": 0.02 * jax.random.normal(k2, (3 * D,), dtype=jnp.float32),
        "W_proj": 0.02 * jax.random.normal(k3, (D, D), dtype=jnp.float32),
        "b_proj": 0.02 * jax.random.normal(k4, (D,), dtype=jnp.float32),
    }

    for causal in (False, True):
        ref = _reference(x, params, n_head=H, right_masking=causal)

        # f32 MXU path: tight numerical check.
        out32 = jax.block_until_ready(multi_head_self_attention(
            x, params, n_head=H, right_masking=causal,
            compute_dtype=jnp.float32))
        assert out32.shape == (B, L, D)
        assert jnp.allclose(out32, ref, atol=1e-4, rtol=1e-4), \
            f"f32 mismatch (causal={causal})"

        # bf16 MXU path (default): looser tolerance (bf16 operands, f32 accum).
        outbf = jax.block_until_ready(multi_head_self_attention(
            x, params, n_head=H, right_masking=causal))
        assert outbf.shape == (B, L, D)
        assert jnp.allclose(outbf, ref, atol=1e-2, rtol=5e-2), \
            f"bf16 mismatch (causal={causal})"

    # Exercise the sequence-padding path (L not a multiple of the seq tile).
    L2 = 7
    x2 = x[:, :L2, :]
    for causal in (False, True):
        ref2 = _reference(x2, params, n_head=H, right_masking=causal)
        out2 = jax.block_until_ready(multi_head_self_attention(
            x2, params, n_head=H, right_masking=causal,
            compute_dtype=jnp.float32))
        assert out2.shape == (B, L2, D)
        assert jnp.allclose(out2, ref2, atol=1e-4, rtol=1e-4), \
            f"padded-L mismatch (causal={causal})"

    print("KERNEL_OK")
</pallas_src>

<mosaic_0001>
module attributes {stable_mosaic.version = 11 : i64} {
  func.func @_qkv_proj_kernel(%arg0: i32, %arg1: i32, %arg2: i32, %arg3: memref<1x8x32xf32, #tpu.memory_space<vmem>>, %arg4: memref<1x32x96xf32, #tpu.memory_space<vmem>>, %arg5: memref<1x1x96xf32, #tpu.memory_space<vmem>>, %arg6: memref<1x4x8x8xf32, #tpu.memory_space<vmem>>, %arg7: memref<1x4x8x8xf32, #tpu.memory_space<vmem>>, %arg8: memref<1x4x8x8xf32, #tpu.memory_space<vmem>>) attributes {dimension_semantics = [#tpu.dimension_semantics<parallel>, #tpu.dimension_semantics<parallel>, #tpu.dimension_semantics<parallel>], iteration_bounds = array<i64: 2, 1, 1>, scalar_prefetch = 0 : i64, scratch_operands = 0 : i64, tpu.core_type = #tpu.core_type<tc>, window_params = [{transform_indices = @transform_0, window_bounds = array<i64: 1, 8, 32>}, {pipeline_mode = #tpu.pipeline_mode<synchronous>, transform_indices = @transform_1, window_bounds = array<i64: 1, 32, 96>}, {pipeline_mode = #tpu.pipeline_mode<synchronous>, transform_indices = @transform_2, window_bounds = array<i64: 1, 1, 96>}, {transform_indices = @transform_3, window_bounds = array<i64: 1, 4, 8, 8>}, {transform_indices = @transform_4, window_bounds = array<i64: 1, 4, 8, 8>}, {transform_indices = @transform_5, window_bounds = array<i64: 1, 4, 8, 8>}]} {
    %c0 = arith.constant 0 : index
    %c0_0 = arith.constant 0 : index
    %c0_1 = arith.constant 0 : index
    %0 = vector.load %arg3[%c0, %c0_0, %c0_1] : memref<1x8x32xf32, #tpu.memory_space<vmem>>, vector<1x8x32xf32>
    %1 = vector.shape_cast %0 : vector<1x8x32xf32> to vector<8x32xf32>
    %2 = arith.index_cast %arg2 : i32 to index
    %c0_2 = arith.constant 0 : index
    %c0_3 = arith.constant 0 : index
    %3 = vector.load %arg4[%2, %c0_2, %c0_3] : memref<1x32x96xf32, #tpu.memory_space<vmem>>, vector<1x32x96xf32>
    %4 = vector.shape_cast %3 : vector<1x32x96xf32> to vector<32x96xf32>
    %5 = arith.index_cast %arg2 : i32 to index
    %c0_4 = arith.constant 0 : index
    %c0_5 = arith.constant 0 : index
    %6 = vector.load %arg5[%5, %c0_4, %c0_5] : memref<1x1x96xf32, #tpu.memory_space<vmem>>, vector<1x1x96xf32>
    %7 = vector.shape_cast %6 : vector<1x1x96xf32> to vector<1x96xf32>
    %cst = arith.constant dense<0.000000e+00> : vector<8x96xf32>
    %8 = tpu.matmul %1, %4, %cst {dimension_numbers = #tpu.dot_dimension_numbers<[1], [0], [0], [1], [0, 0, 1, 1], [], []>} : vector<8x32xf32>, vector<32x96xf32>, vector<8x96xf32> -> vector<8x96xf32>
    %9 = vector.broadcast %7 : vector<1x96xf32> to vector<8x96xf32>
    %10 = arith.addf %8, %9 : vector<8x96xf32>
    %11 = vector.extract_strided_slice %10 {offsets = [0, 0], sizes = [8, 8], strides = [1, 1]} : vector<8x96xf32> to vector<8x8xf32>
    %cst_6 = arith.constant 0.353553385 : f32
    %12 = vector.broadcast %cst_6 : f32 to vector<8x8xf32>
    %13 = arith.mulf %11, %12 : vector<8x8xf32>
    %c0_7 = arith.constant 0 : index
    %c0_8 = arith.constant 0 : index
    %c0_9 = arith.constant 0 : index
    %c0_10 = arith.constant 0 : index
    %14 = vector.load %arg6[%c0_7, %c0_8, %c0_9, %c0_10] : memref<1x4x8x8xf32, #tpu.memory_space<vmem>>, vector<1x1x8x8xf32>
    %15 = vector.shape_cast %14 : vector<1x1x8x8xf32> to vector<8x8xf32>
    %16 = vector.shape_cast %13 : vector<8x8xf32> to vector<1x1x8x8xf32>
    tpu.vector_store %arg6[%c0_7, %c0_8, %c0_9, %c0_10], %16 {strides = array<i32>} : memref<1x4x8x8xf32, #tpu.memory_space<vmem>>, vector<1x1x8x8xf32>,
    %17 = vector.extract_strided_slice %10 {offsets = [0, 8], sizes = [8, 8], strides = [1, 1]} : vector<8x96xf32> to vector<8x8xf32>
    %c0_11 = arith.constant 0 : index
    %c0_12 = arith.constant 0 : index
    %c0_13 = arith.constant 0 : index
    %c0_14 = arith.constant 0 : index
    %18 = vector.load %arg7[%c0_11, %c0_12, %c0_13, %c0_14] : memref<1x4x8x8xf32, #tpu.memory_space<vmem>>, vector<1x1x8x8xf32>
    %19 = vector.shape_cast %18 : vector<1x1x8x8xf32> to vector<8x8xf32>
    %20 = vector.shape_cast %17 : vector<8x8xf32> to vector<1x1x8x8xf32>
    tpu.vector_store %arg7[%c0_11, %c0_12, %c0_13, %c0_14], %20 {strides = array<i32>} : memref<1x4x8x8xf32, #tpu.memory_space<vmem>>, vector<1x1x8x8xf32>,
    %21 = vector.extract_strided_slice %10 {offsets = [0, 16], sizes = [8, 8], strides = [1, 1]} : vector<8x96xf32> to vector<8x8xf32>
    %c0_15 = arith.constant 0 : index
    %c0_16 = arith.constant 0 : index
    %c0_17 = arith.constant 0 : index
    %c0_18 = arith.constant 0 : index
    %22 = vector.load %arg8[%c0_15, %c0_16, %c0_17, %c0_18] : memref<1x4x8x8xf32, #tpu.memory_space<vmem>>, vector<1x1x8x8xf32>
    %23 = vector.shape_cast %22 : vector<1x1x8x8xf32> to vector<8x8xf32>
    %24 = vector.shape_cast %21 : vector<8x8xf32> to vector<1x1x8x8xf32>
    tpu.vector_store %arg8[%c0_15, %c0_16, %c0_17, %c0_18], %24 {strides = array<i32>} : memref<1x4x8x8xf32, #tpu.memory_space<vmem>>, vector<1x1x8x8xf32>,
    %25 = vector.extract_strided_slice %10 {offsets = [0, 24], sizes = [8, 8], strides = [1, 1]} : vector<8x96xf32> to vector<8x8xf32>
    %cst_19 = arith.constant 0.353553385 : f32
    %26 = vector.broadcast %cst_19 : f32 to vector<8x8xf32>
    %27 = arith.mulf %25, %26 : vector<8x8xf32>
    %c0_20 = arith.constant 0 : index
    %c1 = arith.constant 1 : index
    %c0_21 = arith.constant 0 : index
    %c0_22 = arith.constant 0 : index
    %28 = vector.load %arg6[%c0_20, %c1, %c0_21, %c0_22] : memref<1x4x8x8xf32, #tpu.memory_space<vmem>>, vector<1x1x8x8xf32>
    %29 = vector.shape_cast %28 : vector<1x1x8x8xf32> to vector<8x8xf32>
    %30 = vector.shape_cast %27 : vector<8x8xf32> to vector<1x1x8x8xf32>
    tpu.vector_store %arg6[%c0_20, %c1, %c0_21, %c0_22], %30 {strides = array<i32>} : memref<1x4x8x8xf32, #tpu.memory_space<vmem>>, vector<1x1x8x8xf32>,
    %31 = vector.extract_strided_slice %10 {offsets = [0, 32], sizes = [8, 8], strides = [1, 1]} : vector<8x96xf32> to vector<8x8xf32>
    %c0_23 = arith.constant 0 : index
    %c1_24 = arith.constant 1 : index
    %c0_25 = arith.constant 0 : index
    %c0_26 = arith.constant 0 : index
    %32 = vector.load %arg7[%c0_23, %c1_24, %c0_25, %c0_26] : memref<1x4x8x8xf32, #tpu.memory_space<vmem>>, vector<1x1x8x8xf32>
    %33 = vector.shape_cast %32 : vector<1x1x8x8xf32> to vector<8x8xf32>
    %34 = vector.shape_cast %31 : vector<8x8xf32> to vector<1x1x8x8xf32>
    tpu.vector_store %arg7[%c0_23, %c1_24, %c0_25, %c0_26], %34 {strides = array<i32>} : memref<1x4x8x8xf32, #tpu.memory_space<vmem>>, vector<1x1x8x8xf32>,
    %35 = vector.extract_strided_slice %10 {offsets = [0, 40], sizes = [8, 8], strides = [1, 1]} : vector<8x96xf32> to vector<8x8xf32>
    %c0_27 = arith.constant 0 : index
    %c1_28 = arith.constant 1 : index
    %c0_29 = arith.constant 0 : index
    %c0_30 = arith.constant 0 : index
    %36 = vector.load %arg8[%c0_27, %c1_28, %c0_29, %c0_30] : memref<1x4x8x8xf32, #tpu.memory_space<vmem>>, vector<1x1x8x8xf32>
    %37 = vector.shape_cast %36 : vector<1x1x8x8xf32> to vector<8x8xf32>
    %38 = vector.shape_cast %35 : vector<8x8xf32> to vector<1x1x8x8xf32>
    tpu.vector_store %arg8[%c0_27, %c1_28, %c0_29, %c0_30], %38 {strides = array<i32>} : memref<1x4x8x8xf32, #tpu.memory_space<vmem>>, vector<1x1x8x8xf32>,
    %39 = vector.extract_strided_slice %10 {offsets = [0, 48], sizes = [8, 8], strides = [1, 1]} : vector<8x96xf32> to vector<8x8xf32>
    %cst_31 = arith.constant 0.353553385 : f32
    %40 = vector.broadcast %cst_31 : f32 to vector<8x8xf32>
    %41 = arith.mulf %39, %40 : vector<8x8xf32>
    %c0_32 = arith.constant 0 : index
    %c2 = arith.constant 2 : index
    %c0_33 = arith.constant 0 : index
    %c0_34 = arith.constant 0 : index
    %42 = vector.load %arg6[%c0_32, %c2, %c0_33, %c0_34] : memref<1x4x8x8xf32, #tpu.memory_space<vmem>>, vector<1x1x8x8xf32>
    %43 = vector.shape_cast %42 : vector<1x1x8x8xf32> to vector<8x8xf32>
    %44 = vector.shape_cast %41 : vector<8x8xf32> to vector<1x1x8x8xf32>
    tpu.vector_store %arg6[%c0_32, %c2, %c0_33, %c0_34], %44 {strides = array<i32>} : memref<1x4x8x8xf32, #tpu.memory_space<vmem>>, vector<1x1x8x8xf32>,
    %45 = vector.extract_strided_slice %10 {offsets = [0, 56], sizes = [8, 8], strides = [1, 1]} : vector<8x96xf32> to vector<8x8xf32>
    %c0_35 = arith.constant 0 : index
    %c2_36 = arith.constant 2 : index
    %c0_37 = arith.constant 0 : index
    %c0_38 = arith.constant 0 : index
    %46 = vector.load %arg7[%c0_35, %c2_36, %c0_37, %c0_38] : memref<1x4x8x8xf32, #tpu.memory_space<vmem>>, vector<1x1x8x8xf32>
    %47 = vector.shape_cast %46 : vector<1x1x8x8xf32> to vector<8x8xf32>
    %48 = vector.shape_cast %45 : vector<8x8xf32> to vector<1x1x8x8xf32>
    tpu.vector_store %arg7[%c0_35, %c2_36, %c0_37, %c0_38], %48 {strides = array<i32>} : memref<1x4x8x8xf32, #tpu.memory_space<vmem>>, vector<1x1x8x8xf32>,
    %49 = vector.extract_strided_slice %10 {offsets = [0, 64], sizes = [8, 8], strides = [1, 1]} : vector<8x96xf32> to vector<8x8xf32>
    %c0_39 = arith.constant 0 : index
    %c2_40 = arith.constant 2 : index
    %c0_41 = arith.constant 0 : index
    %c0_42 = arith.constant 0 : index
    %50 = vector.load %arg8[%c0_39, %c2_40, %c0_41, %c0_42] : memref<1x4x8x8xf32, #tpu.memory_space<vmem>>, vector<1x1x8x8xf32>
    %51 = vector.shape_cast %50 : vector<1x1x8x8xf32> to vector<8x8xf32>
    %52 = vector.shape_cast %49 : vector<8x8xf32> to vector<1x1x8x8xf32>
    tpu.vector_store %arg8[%c0_39, %c2_40, %c0_41, %c0_42], %52 {strides = array<i32>} : memref<1x4x8x8xf32, #tpu.memory_space<vmem>>, vector<1x1x8x8xf32>,
    %53 = vector.extract_strided_slice %10 {offsets = [0, 72], sizes = [8, 8], strides = [1, 1]} : vector<8x96xf32> to vector<8x8xf32>
    %cst_43 = arith.constant 0.353553385 : f32
    %54 = vector.broadcast %cst_43 : f32 to vector<8x8xf32>
    %55 = arith.mulf %53, %54 : vector<8x8xf32>
    %c0_44 = arith.constant 0 : index
    %c3 = arith.constant 3 : index
    %c0_45 = arith.constant 0 : index
    %c0_46 = arith.constant 0 : index
    %56 = vector.load %arg6[%c0_44, %c3, %c0_45, %c0_46] : memref<1x4x8x8xf32, #tpu.memory_space<vmem>>, vector<1x1x8x8xf32>
    %57 = vector.shape_cast %56 : vector<1x1x8x8xf32> to vector<8x8xf32>
    %58 = vector.shape_cast %55 : vector<8x8xf32> to vector<1x1x8x8xf32>
    tpu.vector_store %arg6[%c0_44, %c3, %c0_45, %c0_46], %58 {strides = array<i32>} : memref<1x4x8x8xf32, #tpu.memory_space<vmem>>, vector<1x1x8x8xf32>,
    %59 = vector.extract_strided_slice %10 {offsets = [0, 80], sizes = [8, 8], strides = [1, 1]} : vector<8x96xf32> to vector<8x8xf32>
    %c0_47 = arith.constant 0 : index
    %c3_48 = arith.constant 3 : index
    %c0_49 = arith.constant 0 : index
    %c0_50 = arith.constant 0 : index
    %60 = vector.load %arg7[%c0_47, %c3_48, %c0_49, %c0_50] : memref<1x4x8x8xf32, #tpu.memory_space<vmem>>, vector<1x1x8x8xf32>
    %61 = vector.shape_cast %60 : vector<1x1x8x8xf32> to vector<8x8xf32>
    %62 = vector.shape_cast %59 : vector<8x8xf32> to vector<1x1x8x8xf32>
    tpu.vector_store %arg7[%c0_47, %c3_48, %c0_49, %c0_50], %62 {strides = array<i32>} : memref<1x4x8x8xf32, #tpu.memory_space<vmem>>, vector<1x1x8x8xf32>,
    %63 = vector.extract_strided_slice %10 {offsets = [0, 88], sizes = [8, 8], strides = [1, 1]} : vector<8x96xf32> to vector<8x8xf32>
    %c0_51 = arith.constant 0 : index
    %c3_52 = arith.constant 3 : index
    %c0_53 = arith.constant 0 : index
    %c0_54 = arith.constant 0 : index
    %64 = vector.load %arg8[%c0_51, %c3_52, %c0_53, %c0_54] : memref<1x4x8x8xf32, #tpu.memory_space<vmem>>, vector<1x1x8x8xf32>
    %65 = vector.shape_cast %64 : vector<1x1x8x8xf32> to vector<8x8xf32>
    %66 = vector.shape_cast %63 : vector<8x8xf32> to vector<1x1x8x8xf32>
    tpu.vector_store %arg8[%c0_51, %c3_52, %c0_53, %c0_54], %66 {strides = array<i32>} : memref<1x4x8x8xf32, #tpu.memory_space<vmem>>, vector<1x1x8x8xf32>,
    return
  }
  func.func @transform_0(%arg0: i32, %arg1: i32, %arg2: i32) -> (i32, i32, i32) {
    %c0_i32 = arith.constant 0 : i32
    %c0_i32_0 = arith.constant 0 : i32
    return %arg0, %arg1, %c0_i32 : i32, i32, i32
  }
  func.func @transform_1(%arg0: i32, %arg1: i32, %arg2: i32) -> (i32, i32, i32) {
    %c0_i32 = arith.constant 0 : i32
    %c0_i32_0 = arith.constant 0 : i32
    %c0_i32_1 = arith.constant 0 : i32
    %c0_i32_2 = arith.constant 0 : i32
    return %c0_i32, %c0_i32_0, %c0_i32_1 : i32, i32, i32
  }
  func.func @transform_2(%arg0: i32, %arg1: i32, %arg2: i32) -> (i32, i32, i32) {
    %c0_i32 = arith.constant 0 : i32
    %c0_i32_0 = arith.constant 0 : i32
    %c0_i32_1 = arith.constant 0 : i32
    %c0_i32_2 = arith.constant 0 : i32
    return %c0_i32, %c0_i32_0, %c0_i32_1 : i32, i32, i32
  }
  func.func @transform_3(%arg0: i32, %arg1: i32, %arg2: i32) -> (i32, i32, i32, i32) {
    %c0_i32 = arith.constant 0 : i32
    %c0_i32_0 = arith.constant 0 : i32
    return %arg0, %arg2, %arg1, %c0_i32 : i32, i32, i32, i32
  }
  func.func @transform_4(%arg0: i32, %arg1: i32, %arg2: i32) -> (i32, i32, i32, i32) {
    %c0_i32 = arith.constant 0 : i32
    %c0_i32_0 = arith.constant 0 : i32
    return %arg0, %arg2, %arg1, %c0_i32 : i32, i32, i32, i32
  }
  func.func @transform_5(%arg0: i32, %arg1: i32, %arg2: i32) -> (i32, i32, i32, i32) {
    %c0_i32 = arith.constant 0 : i32
    %c0_i32_0 = arith.constant 0 : i32
    return %arg0, %arg2, %arg1, %c0_i32 : i32, i32, i32, i32
  }
}

</mosaic_0001>

<llo_original>
// kernel: tpu_custom_call.1
$region0: #{tpu_custom_call.1}
  #allocation0 [shape = 'u32[]', space=smem, size = 0x4, offset = 0x4, fixed_abs, tag = 'smem constant byte address 0x4 - core index']
  #allocation1 [shape = 'u32[72,128]{1,0:T(1,128)}', space=vmem, size = 0x9000, scoped, tag = 'internal scratch']
  %s0 = inlined_call_operand.hbm [shape: f32[2,8,32], index: 0, kind: input, shape index: {}]
  %s1 = inlined_call_operand.hbm [shape: f32[1,32,96], index: 1, kind: input, shape index: {}]
  %s2 = inlined_call_operand.vmem [shape: f32[1,1,96], index: 2, kind: input, shape index: {}]
  %s3 = inlined_call_operand.hbm [shape: f32[2,4,8,8], index: 3, kind: output, shape index: {0}]
  %s4 = inlined_call_operand.hbm [shape: f32[2,4,8,8], index: 4, kind: output, shape index: {1}]
  %s5 = inlined_call_operand.hbm [shape: f32[2,4,8,8], index: 5, kind: output, shape index: {2}]
  %6 = xla_tuple %s3, %s4, %s5
  %s7 = sld [smem:[#allocation0]]
  $region69: #{tpu_custom_call.1} parent=0
    _
  %s9 = ssub.s32 1, %s7
  %s10 = scalar_select 0, %s9, %s7
  $region1: #{tpu_custom_call.1} parent=0
    #allocation2 [shape = 'u8[8192]{0}', space=vmem, size = 0x2000, scoped, tag = 'input window, operand 0']
    #allocation3 [shape = 's32[2]{0}', space=sflag, size = 0x8, scoped, tag = 'scoped memory for tpu_custom_call.1']
    #allocation4 [shape = 's32[2]{0}', space=sflag, size = 0x8, scoped, tag = 'scoped memory for tpu_custom_call.1']
    #allocation5 [shape = 'u8[16384]{0}', space=vmem, size = 0x4000, scoped, tag = 'input window, operand 1, single buffered']
    #allocation6 [shape = 's32[1]{0}', space=sflag, size = 0x4, scoped, tag = 'scoped memory for tpu_custom_call.1']
    #allocation7 [shape = 'u8[32768]{0}', space=vmem, size = 0x8000, scoped, tag = 'output window, operand 0']
    #allocation8 [shape = 'u8[32768]{0}', space=vmem, size = 0x8000, scoped, tag = 'output window, operand 1']
    #allocation9 [shape = 's32[2]{0}', space=sflag, size = 0x8, scoped, tag = 'scoped memory for tpu_custom_call.1']
    #allocation10 [shape = 'u8[32768]{0}', space=vmem, size = 0x8000, scoped, tag = 'output window, operand 2']
    %11 = vsyncpa [#allocation3], 0
    %s12 = scalar_lea.sflag [#allocation3], 1
    %13 = vsyncpa %s12, 0
    %14 = vsyncpa [#allocation6], 0
    %15 = vsyncpa [#allocation4], 0
    %s16 = scalar_lea.sflag [#allocation4], 1
    %17 = vsyncpa %s16, 0
    %18 = vsyncpa [#allocation9], 0
    %s19 = scalar_lea.sflag [#allocation9], 1
    %20 = vsyncpa %s19, 0
    loop: start=0, step=1, limit=4
    $region2: #{tpu_custom_call.1} parent=1 // loop_pre_header
      _
    $region3: #{tpu_custom_call.1} parent=1 // loop_header
      %s22 = sphi 0, %s26
      %p23 = scmp.ge.s32.totalorder %s22, 4
      %s29 = sphi 0, %s48
      %s30 = sphi 0, %s44
      %s31 = sphi 0, %s40
      %s32 = sphi 0, %s29
      %s33 = sphi 0, %s30
      %s34 = sphi 0, %s31
      %s35 = sphi 0, %s32
      %s36 = sphi 0, %s33
      %s37 = sphi 0, %s34
      %s53 = sphi 0, %s55
      %s56 = sphi 0, %s53
      %s57 = sphi 0, %s56
      %s73 = sphi 0, %s57
      %s77 = sphi 0, %s77
      %s79 = sphi 0, %s77
      %s80 = sphi 0, %s79
      %s94 = sphi 0, %s80
      %s98 = sphi 0, %s98
      %s100 = sphi 0, %s98
      %s101 = sphi 0, %s100
      %s115 = sphi 0, %s101
      %s125 = sphi 0, %s127
      %s128 = sphi 0, %s125
      %s129 = sphi 0, %s128
      %s145 = sphi 0, %s129
      %s155 = sphi 0, %s157
      %s158 = sphi 0, %s155
      %s159 = sphi 0, %s158
      %s175 = sphi 0, %s159
      %s185 = sphi 0, %s187
      %s188 = sphi 0, %s185
      %s189 = sphi 0, %s188
      %s205 = sphi 0, %s189
    $region4: #{tpu_custom_call.1} parent=1 // loop_header_branch
      %25 = sbr.rel (%p23) target = $region8
    $region5: #{tpu_custom_call.1} parent=1 // loop_body
      %s27 = ssub.s32 %s22, 1
      %s28 = ssub.s32 %s22, 2
      %s38 = sadd.s32 1, %s31
      %p39 = scmp.ge.s32.totalorder %s38, 1
      %s40 = scalar_select %p39, 0, %s38
      %s41 = sadd.s32 1, %s30
      %s42 = scalar_select %p39, %s41, %s30
      %p43 = scmp.ge.s32.totalorder %s42, 1
      %s44 = scalar_select %p43, 0, %s42
      %s45 = sadd.s32 1, %s29
      %s46 = scalar_select %p43, %s45, %s29
      %p47 = scmp.ge.s32.totalorder %s46, 2
      %s48 = scalar_select %p47, 0, %s46
      %s49 = ssub.s32 %s29, %s48
      %s50 = ssub.s32 %s30, %s44
      %s51 = sor.u32 %s49, %s50
      %p52 = scmp.eq.s32.totalorder %s51, 0
      %s54 = sadd.s32 %s53, 1
      %s55 = scalar_select %p52, %s53, %s54
      %p58 = pneg %p52
      %p59 = scmp.eq.s32.totalorder %s22, 1
      %p60 = por %p58, %p59
      %p61 = scmp.ne.s32.totalorder %s53, %s56
      %p62 = scmp.eq.s32.totalorder %s22, 0
      %p63 = por %p61, %p62
      %p64 = scmp.ne.s32.totalorder %s53, %s56
      %p65 = scmp.eq.s32.totalorder %s27, 1
      %p66 = por %p64, %p65
      %p67 = scmp.ne.s32.totalorder %s56, %s57
      %p68 = scmp.eq.s32.totalorder %s27, 0
      %p69 = por %p67, %p68
      %p70 = scmp.ne.s32.totalorder %s56, %s57
      %p71 = scmp.eq.s32.totalorder %s28, 1
      %p72 = por %p70, %p71
      %p74 = scmp.ne.s32.totalorder %s57, %s73
      %p75 = scmp.eq.s32.totalorder %s28, 0
      %p76 = por %p74, %p75
      %s78 = sadd.s32 %s77, 1
      %p81 = scmp.eq.s32.totalorder %s22, 1
      %p82 = scmp.ne.s32.totalorder %s77, %s79
      %p83 = scmp.eq.s32.totalorder %s22, 0
      %p84 = por %p82, %p83
      %p85 = scmp.ne.s32.totalorder %s77, %s79
      %p86 = scmp.eq.s32.totalorder %s27, 1
      %p87 = por %p85, %p86
      %p88 = scmp.ne.s32.totalorder %s79, %s80
      %p89 = scmp.eq.s32.totalorder %s27, 0
      %p90 = por %p88, %p89
      %p91 = scmp.ne.s32.totalorder %s79, %s80
      %p92 = scmp.eq.s32.totalorder %s28, 1
      %p93 = por %p91, %p92
      %p95 = scmp.ne.s32.totalorder %s80, %s94
      %p96 = scmp.eq.s32.totalorder %s28, 0
      %p97 = por %p95, %p96
      %s99 = sadd.s32 %s98, 1
      %p102 = scmp.eq.s32.totalorder %s22, 1
      %p103 = scmp.ne.s32.totalorder %s98, %s100
      %p104 = scmp.eq.s32.totalorder %s22, 0
      %p105 = por %p103, %p104
      %p106 = scmp.ne.s32.totalorder %s98, %s100
      %p107 = scmp.eq.s32.totalorder %s27, 1
      %p108 = por %p106, %p107
      %p109 = scmp.ne.s32.totalorder %s100, %s101
      %p110 = scmp.eq.s32.totalorder %s27, 0
      %p111 = por %p109, %p110
      %p112 = scmp.ne.s32.totalorder %s100, %s101
      %p113 = scmp.eq.s32.totalorder %s28, 1
      %p114 = por %p112, %p113
      %p116 = scmp.ne.s32.totalorder %s101, %s115
      %p117 = scmp.eq.s32.totalorder %s28, 0
      %p118 = por %p116, %p117
      %s119 = ssub.s32 %s29, %s48
      %s120 = ssub.s32 %s31, %s40
      %s121 = sor.u32 %s119, %s120
      %s122 = ssub.s32 %s30, %s44
      %s123 = sor.u32 %s121, %s122
      %p124 = scmp.eq.s32.totalorder %s123, 0
      %s126 = sadd.s32 %s125, 1
      %s127 = scalar_select %p124, %s125, %s126
      %p130 = pneg %p124
      %p131 = scmp.eq.s32.totalorder %s22, 1
      %p132 = por %p130, %p131
      %p133 = scmp.ne.s32.totalorder %s125, %s128
      %p134 = scmp.eq.s32.totalorder %s22, 0
      %p135 = por %p133, %p134
      %p136 = scmp.ne.s32.totalorder %s125, %s128
      %p137 = scmp.eq.s32.totalorder %s27, 1
      %p138 = por %p136, %p137
      %p139 = scmp.ne.s32.totalorder %s128, %s129
      %p140 = scmp.eq.s32.totalorder %s27, 0
      %p141 = por %p139, %p140
      %p142 = scmp.ne.s32.totalorder %s128, %s129
      %p143 = scmp.eq.s32.totalorder %s28, 1
      %p144 = por %p142, %p143
      %p146 = scmp.ne.s32.totalorder %s129, %s145
      %p147 = scmp.eq.s32.totalorder %s28, 0
      %p148 = por %p146, %p147
      %s149 = ssub.s32 %s29, %s48
      %s150 = ssub.s32 %s31, %s40
      %s151 = sor.u32 %s149, %s150
      %s152 = ssub.s32 %s30, %s44
      %s153 = sor.u32 %s151, %s152
      %p154 = scmp.eq.s32.totalorder %s153, 0
      %s156 = sadd.s32 %s155, 1
      %s157 = scalar_select %p154, %s155, %s156
      %p160 = pneg %p154
      %p161 = scmp.eq.s32.totalorder %s22, 1
      %p162 = por %p160, %p161
      %p163 = scmp.ne.s32.totalorder %s155, %s158
      %p164 = scmp.eq.s32.totalorder %s22, 0
      %p165 = por %p163, %p164
      %p166 = scmp.ne.s32.totalorder %s155, %s158
      %p167 = scmp.eq.s32.totalorder %s27, 1
      %p168 = por %p166, %p167
      %p169 = scmp.ne.s32.totalorder %s158, %s159
      %p170 = scmp.eq.s32.totalorder %s27, 0
      %p171 = por %p169, %p170
      %p172 = scmp.ne.s32.totalorder %s158, %s159
      %p173 = scmp.eq.s32.totalorder %s28, 1
      %p174 = por %p172, %p173
      %p176 = scmp.ne.s32.totalorder %s159, %s175
      %p177 = scmp.eq.s32.totalorder %s28, 0
      %p178 = por %p176, %p177
      %s179 = ssub.s32 %s29, %s48
      %s180 = ssub.s32 %s31, %s40
      %s181 = sor.u32 %s179, %s180
      %s182 = ssub.s32 %s30, %s44
      %s183 = sor.u32 %s181, %s182
      %p184 = scmp.eq.s32.totalorder %s183, 0
      %s186 = sadd.s32 %s185, 1
      %s187 = scalar_select %p184, %s185, %s186
      %p190 = pneg %p184
      %p191 = scmp.eq.s32.totalorder %s22, 1
      %p192 = por %p190, %p191
      %p193 = scmp.ne.s32.totalorder %s185, %s188
      %p194 = scmp.eq.s32.totalorder %s22, 0
      %p195 = por %p193, %p194
      %p196 = scmp.ne.s32.totalorder %s185, %s188
      %p197 = scmp.eq.s32.totalorder %s27, 1
      %p198 = por %p196, %p197
      %p199 = scmp.ne.s32.totalorder %s188, %s189
      %p200 = scmp.eq.s32.totalorder %s27, 0
      %p201 = por %p199, %p200
      %p202 = scmp.ne.s32.totalorder %s188, %s189
      %p203 = scmp.eq.s32.totalorder %s28, 1
      %p204 = por %p202, %p203
      %p206 = scmp.ne.s32.totalorder %s189, %s205
      %p207 = scmp.eq.s32.totalorder %s28, 0
      %p208 = por %p206, %p207
      %p209 = scmp.le.s32.totalorder 1, %s22
      %p210 = scmp.lt.s32.totalorder %s22, 3
      %p211 = pnand %p209, %p210
      %p212 = pneg %p211
      // Predicated region
      $region9: #{tpu_custom_call.1} parent=5 // pred_check
        _
      $region10: #{tpu_custom_call.1} parent=5 // pred_check_branch
        %214 = sbr.rel (%p211) target = $region12
      $region11: #{tpu_custom_call.1} parent=5 // pred_region
        %s215 = ssub.s32 %s22, 1
        // Predicated region
        $region13: #{tpu_custom_call.1} parent=11 // pred_check
          %p216 = pneg %p90
        $region14: #{tpu_custom_call.1} parent=11 // pred_check_branch
          %218 = sbr.rel (%p216) target = $region16
        $region15: #{tpu_custom_call.1} parent=11 // pred_region
          %220 = vsyncadd [#allocation6], 0
          %s221 = sshll.u32 %s1, 4
          %s222 = int_to_ptr.hbm [resolvable:$true] %s221
          %s223 = sshll.u32 [#allocation5], 4
          %s224 = int_to_ptr.vmem [resolvable:$true] %s223
          %229 = dma.hbm_to_vmem [thread:$0]  %s222, 512, %s224, [#allocation6], 128, 128, 8
        $region16: #{tpu_custom_call.1} parent=11 // pred_fallthru
          _
        // Predicated region
        $region17: #{tpu_custom_call.1} parent=11 // pred_check
          %p230 = pneg %p111
        $region18: #{tpu_custom_call.1} parent=11 // pred_check_branch
          %232 = sbr.rel (%p230) target = $region20
        $region19: #{tpu_custom_call.1} parent=11 // pred_region
          _
        $region20: #{tpu_custom_call.1} parent=11 // pred_fallthru
          _
      $region12: #{tpu_custom_call.1} parent=5 // pred_fallthru
        _
      %p233 = scmp.lt.s32.totalorder %s22, 2
      // Predicated region
      $region21: #{tpu_custom_call.1} parent=5 // pred_check
        %p234 = pneg %p233
      $region22: #{tpu_custom_call.1} parent=5 // pred_check_branch
        %236 = sbr.rel (%p234) target = $region24
      $region23: #{tpu_custom_call.1} parent=5 // pred_region
        // Predicated region
        $region25: #{tpu_custom_call.1} parent=23 // pred_check
          %p237 = pneg %p63
        $region26: #{tpu_custom_call.1} parent=23 // pred_check_branch
          %239 = sbr.rel (%p237) target = $region28
        $region27: #{tpu_custom_call.1} parent=23 // pred_region
          %s240 = sand.u32 %s53, 1
          %s241 = scalar_lea.sflag [#allocation3], %s240
          %s242 = sand.u32 %s53, 1
          %s243 = smul.addr %s242, 8
          %s244 = scalar_lea.vmem [#allocation2], %s243
          %246 = vsyncadd %s241, 0
          %s247 = sadd.s32 %s30, %s29
          %s248 = smul.addr %s247, 8
          %s249 = scalar_lea.hbm %s0, %s248
          %s251 = sshll.u32 %s249, 4
          %s252 = int_to_ptr.hbm [resolvable:$true] %s251
          %s253 = sshll.u32 %s244, 4
          %s254 = int_to_ptr.vmem [resolvable:$true] %s253
          %256 = dma.hbm_to_vmem [thread:$0]  %s252, 128, %s254, %s241
        $region28: #{tpu_custom_call.1} parent=23 // pred_fallthru
          _
      $region24: #{tpu_custom_call.1} parent=5 // pred_fallthru
        _
      %p257 = scmp.le.s32.totalorder 1, %s22
      %p258 = scmp.lt.s32.totalorder %s22, 3
      %p259 = pnand %p257, %p258
      %p260 = pneg %p259
      // Predicated region
      $region29: #{tpu_custom_call.1} parent=5 // pred_check
        _
      $region30: #{tpu_custom_call.1} parent=5 // pred_check_branch
        %262 = sbr.rel (%p259) target = $region32
      $region31: #{tpu_custom_call.1} parent=5 // pred_region
        %s263 = ssub.s32 %s22, 1
        %s264 = sand.u32 %s56, 1
        %s265 = scalar_lea.sflag [#allocation3], %s264
        %s266 = sand.u32 %s56, 1
        %s267 = smul.addr %s266, 8
        %s268 = scalar_lea.vmem [#allocation2], %s267
        // Predicated region
        $region33: #{tpu_custom_call.1} parent=31 // pred_check
          %p269 = pneg %p69
        $region34: #{tpu_custom_call.1} parent=31 // pred_check_branch
          %271 = sbr.rel (%p269) target = $region36
        $region35: #{tpu_custom_call.1} parent=31 // pred_region
          %273 = dma.done %s265, 128
        $region36: #{tpu_custom_call.1} parent=31 // pred_fallthru
          _
        // Predicated region
        $region37: #{tpu_custom_call.1} parent=31 // pred_check
          %p274 = pneg %p90
        $region38: #{tpu_custom_call.1} parent=31 // pred_check_branch
          %276 = sbr.rel (%p274) target = $region40
        $region39: #{tpu_custom_call.1} parent=31 // pred_region
          %278 = dma.done [#allocation6], 512
        $region40: #{tpu_custom_call.1} parent=31 // pred_fallthru
          _
        %s279 = sand.u32 %s56, 1
        %s280 = scalar_lea.sflag [#allocation3], %s279
        %s281 = sand.u32 %s56, 1
        %s282 = smul.addr %s281, 8
        %s283 = scalar_lea.vmem [#allocation2], %s282
        %p284 = pneg %p69
        %p285 = pneg %p66
        %p286 = pneg %p90
        %p287 = pneg %p87
        %p288 = pneg %p111
        %p289 = pneg %p108
        %p290 = pneg %p141
        %p291 = pneg %p138
        %s292 = sand.u32 %s128, 1
        %s293 = scalar_lea.sflag [#allocation4], %s292
        %s294 = sand.u32 %s128, 1
        %s295 = smul.addr %s294, 32
        %s296 = scalar_lea.vmem [#allocation7], %s295
        %p297 = pneg %p171
        %p298 = pneg %p168
        %s299 = sand.u32 %s27, 1
        %s300 = scalar_lea.sflag [#allocation9], %s299
        %s301 = sand.u32 %s158, 1
        %s302 = smul.addr %s301, 32
        %s303 = scalar_lea.vmem [#allocation8], %s302
        %p304 = pneg %p201
        %p305 = pneg %p198
        %s306 = sand.u32 %s27, 1
        %s307 = scalar_lea.sflag [#allocation9], %s306
        %s308 = sand.u32 %s188, 1
        %s309 = smul.addr %s308, 32
        %s310 = scalar_lea.vmem [#allocation10], %s309
        %s311 = smul.u32 4, %s34
        %s312 = smul.u32 4, %s34
        %s313 = smul.u32 4, %s34
        %v314 = vld [vmem:[%s268] sm:$0xff]
        %s315 = smul.u32 %s34, 32
        %s316 = scalar_lea.vmem [#allocation5], %s315
        %v317 = vld [vmem:[%s316] sm:$0xff]
        %v318 = vld [vmem:[%s316 + $0x8] sm:$0xff]
        %v319 = vld [vmem:[%s316 + $0x10] sm:$0xff]
        %v320 = vld [vmem:[%s316 + $0x18] sm:$0xff]
        %s321 = scalar_lea.vmem %s2, %s34
        %v322 = vld [vmem:[%s321] sm:$0x1]
        %v324 = vperm.slane %v322, 0
        %vm326 = vcmask 261120
        %v328 = vsel %vm326, %v314, 0
        %330 = vmatpush.msra.mxu0 0.0
        %331 = vmatpush.msra.mxu0 0.0
        %332 = vmatpush.msra.mxu0 0.0
        %333 = vmatpush.msra.mxu0 0.0
        %334 = vmatpush.msra.mxu0 0.0
        %335 = vmatpush.msra.mxu0 0.0
        %336 = vmatpush.msra.mxu0 0.0
        %337 = vmatpush.msra.mxu0 0.0
        %338 = vmatpush.msra.mxu0 0.0
        %339 = vmatpush.msra.mxu0 0.0
        %340 = vmatpush.msra.mxu0 0.0
        %341 = vmatpush.msra.mxu0 0.0
        %342 = vmatpush.msra.mxu0 %v320
        %343 = vmatpush.msra.mxu0 %v319
        %344 = vmatpush.msra.mxu0 %v318
        %345 = vmatpush.msra.mxu0 %v317
        %346 = vmatmul.f32.gmra.mxu0 %v328
        %v347 = vpop.f32.mrf.mxu0
        %v348 = vadd.f32 %v324, %v347
        %349 = vdwg.mxu0
        %v350 = vmul.f32 %v348, 0.35355338
        %vm351 = vcmask 64512
        %352 = vst.msk [vmem:[%s296] sm:$0xff] %vm351, %v350
        %354 = vrot.lane.b32.xlu0 %v348, 120
        %v355 = vpop.permute.xlu0 %354
        %357 = vst.msk [vmem:[%s303] sm:$0xff] %vm351, %v355
        %358 = vrot.lane.b32.xlu0 %v348, 112
        %v359 = vpop.permute.xlu0 %358
        %361 = vst.msk [vmem:[%s310] sm:$0xff] %vm351, %v359
        %363 = vrot.lane.b32.xlu0 %v350, 104
        %v364 = vpop.permute.xlu0 %363
        %s366 = scalar_lea.vmem %s296, 8 [#allocation7]
        %367 = vst.msk [vmem:[%s366] sm:$0xff] %vm351, %v364
        %368 = vrot.lane.b32.xlu0 %v348, 96
        %v369 = vpop.permute.xlu0 %368
        %s371 = scalar_lea.vmem %s303, 8 [#allocation8]
        %372 = vst.msk [vmem:[%s371] sm:$0xff] %vm351, %v369
        %373 = vrot.lane.b32.xlu0 %v348, 88
        %v374 = vpop.permute.xlu0 %373
        %s376 = scalar_lea.vmem %s310, 8 [#allocation10]
        %377 = vst.msk [vmem:[%s376] sm:$0xff] %vm351, %v374
        %378 = vrot.lane.b32.xlu0 %v350, 80
        %v379 = vpop.permute.xlu0 %378
        %s381 = scalar_lea.vmem %s296, 16 [#allocation7]
        %382 = vst.msk [vmem:[%s381] sm:$0xff] %vm351, %v379
        %383 = vrot.lane.b32.xlu0 %v348, 72
        %v384 = vpop.permute.xlu0 %383
        %s386 = scalar_lea.vmem %s303, 16 [#allocation8]
        %387 = vst.msk [vmem:[%s386] sm:$0xff] %vm351, %v384
        %388 = vrot.lane.b32.xlu0 %v348, 64
        %v389 = vpop.permute.xlu0 %388
        %s391 = scalar_lea.vmem %s310, 16 [#allocation10]
        %392 = vst.msk [vmem:[%s391] sm:$0xff] %vm351, %v389
        %393 = vrot.lane.b32.xlu0 %v350, 56
        %v394 = vpop.permute.xlu0 %393
        %s396 = scalar_lea.vmem %s296, 24 [#allocation7]
        %397 = vst.msk [vmem:[%s396] sm:$0xff] %vm351, %v394
        %398 = vrot.lane.b32.xlu0 %v348, 48
        %v399 = vpop.permute.xlu0 %398
        %s401 = scalar_lea.vmem %s303, 24 [#allocation8]
        %402 = vst.msk [vmem:[%s401] sm:$0xff] %vm351, %v399
        %403 = vrot.lane.b32.xlu0 %v348, 40
        %v404 = vpop.permute.xlu0 %403
        %s406 = scalar_lea.vmem %s310, 24 [#allocation10]
        %407 = vst.msk [vmem:[%s406] sm:$0xff] %vm351, %v404
        %s408 = sand.u32 %s128, 1
        %s409 = scalar_lea.sflag [#allocation4], %s408
        %s410 = sand.u32 %s128, 1
        %s411 = smul.addr %s410, 32
        %s412 = scalar_lea.vmem [#allocation7], %s411
        %s413 = sand.u32 %s27, 1
        %s414 = scalar_lea.sflag [#allocation9], %s413
        %s415 = sand.u32 %s158, 1
        %s416 = smul.addr %s415, 32
        %s417 = scalar_lea.vmem [#allocation8], %s416
        %s418 = sand.u32 %s27, 1
        %s419 = scalar_lea.sflag [#allocation9], %s418
        %s420 = sand.u32 %s188, 1
        %s421 = smul.addr %s420, 32
        %s422 = scalar_lea.vmem [#allocation10], %s421
        // Predicated region
        $region41: #{tpu_custom_call.1} parent=31 // pred_check
          %p423 = pneg %p138
        $region42: #{tpu_custom_call.1} parent=31 // pred_check_branch
          %425 = sbr.rel (%p423) target = $region44
        $region43: #{tpu_custom_call.1} parent=31 // pred_region
          %s426 = smul.u32 4, %s34
          %428 = vsyncadd %s409, 0
          %s429 = sadd.s32 %s33, %s426
          %s430 = smul.addr %s32, 4
          %s431 = sadd.s32 %s429, %s430
          %s432 = smul.addr %s431, 8
          %s433 = scalar_lea.hbm %s3, %s432
          %s434 = sshll.u32 %s412, 4
          %s435 = int_to_ptr.vmem [resolvable:$true] %s434
          %s436 = sshll.u32 %s433, 4
          %s437 = int_to_ptr.hbm [resolvable:$true] %s436
          %442 = dma.vmem_to_hbm [thread:$0]  %s435, 512, %s437, %s409, 128, 128, 8
        $region44: #{tpu_custom_call.1} parent=31 // pred_fallthru
          _
        // Predicated region
        $region45: #{tpu_custom_call.1} parent=31 // pred_check
          %p443 = pneg %p168
        $region46: #{tpu_custom_call.1} parent=31 // pred_check_branch
          %445 = sbr.rel (%p443) target = $region48
        $region47: #{tpu_custom_call.1} parent=31 // pred_region
          %s446 = smul.u32 4, %s34
          %448 = vsyncadd %s414, 0
          %s449 = sadd.s32 %s33, %s446
          %s450 = smul.addr %s32, 4
          %s451 = sadd.s32 %s449, %s450
          %s452 = smul.addr %s451, 8
          %s453 = scalar_lea.hbm %s4, %s452
          %s454 = sshll.u32 %s417, 4
          %s455 = int_to_ptr.vmem [resolvable:$true] %s454
          %s456 = sshll.u32 %s453, 4
          %s457 = int_to_ptr.hbm [resolvable:$true] %s456
          %462 = dma.vmem_to_hbm [thread:$0]  %s455, 512, %s457, %s414, 128, 128, 8
        $region48: #{tpu_custom_call.1} parent=31 // pred_fallthru
          _
        // Predicated region
        $region49: #{tpu_custom_call.1} parent=31 // pred_check
          %p463 = pneg %p198
        $region50: #{tpu_custom_call.1} parent=31 // pred_check_branch
          %465 = sbr.rel (%p463) target = $region52
        $region51: #{tpu_custom_call.1} parent=31 // pred_region
          %s466 = smul.u32 4, %s34
          %468 = vsyncadd %s419, 0
          %s469 = sadd.s32 %s33, %s466
          %s470 = smul.addr %s32, 4
          %s471 = sadd.s32 %s469, %s470
          %s472 = smul.addr %s471, 8
          %s473 = scalar_lea.hbm %s5, %s472
          %s474 = sshll.u32 %s422, 4
          %s475 = int_to_ptr.vmem [resolvable:$true] %s474
          %s476 = sshll.u32 %s473, 4
          %s477 = int_to_ptr.hbm [resolvable:$true] %s476
          %482 = dma.vmem_to_hbm [thread:$0]  %s475, 512, %s477, %s419, 128, 128, 8
        $region52: #{tpu_custom_call.1} parent=31 // pred_fallthru
          _
      $region32: #{tpu_custom_call.1} parent=5 // pred_fallthru
        _
      %p483 = scmp.le.s32.totalorder 2, %s22
      // Predicated region
      $region53: #{tpu_custom_call.1} parent=5 // pred_check
        %p484 = pneg %p483
      $region54: #{tpu_custom_call.1} parent=5 // pred_check_branch
        %486 = sbr.rel (%p484) target = $region56
      $region55: #{tpu_custom_call.1} parent=5 // pred_region
        %s487 = ssub.s32 %s22, 2
        // Predicated region
        $region57: #{tpu_custom_call.1} parent=55 // pred_check
          %p488 = pneg %p144
        $region58: #{tpu_custom_call.1} parent=55 // pred_check_branch
          %490 = sbr.rel (%p488) target = $region60
        $region59: #{tpu_custom_call.1} parent=55 // pred_region
          %s491 = sand.u32 %s129, 1
          %s492 = scalar_lea.sflag [#allocation4], %s491
          %s493 = sand.u32 %s129, 1
          %s494 = smul.addr %s493, 32
          %s495 = scalar_lea.vmem [#allocation7], %s494
          %497 = dma.done %s492, 512
        $region60: #{tpu_custom_call.1} parent=55 // pred_fallthru
          _
        // Predicated region
        $region61: #{tpu_custom_call.1} parent=55 // pred_check
          %p498 = pneg %p174
        $region62: #{tpu_custom_call.1} parent=55 // pred_check_branch
          %500 = sbr.rel (%p498) target = $region64
        $region63: #{tpu_custom_call.1} parent=55 // pred_region
          %s501 = sand.u32 %s28, 1
          %s502 = scalar_lea.sflag [#allocation9], %s501
          %s503 = sand.u32 %s159, 1
          %s504 = smul.addr %s503, 32
          %s505 = scalar_lea.vmem [#allocation8], %s504
          %507 = dma.done %s502, 512
        $region64: #{tpu_custom_call.1} parent=55 // pred_fallthru
          _
        // Predicated region
        $region65: #{tpu_custom_call.1} parent=55 // pred_check
          %p508 = pneg %p204
        $region66: #{tpu_custom_call.1} parent=55 // pred_check_branch
          %510 = sbr.rel (%p508) target = $region68
        $region67: #{tpu_custom_call.1} parent=55 // pred_region
          %s511 = sand.u32 %s28, 1
          %s512 = scalar_lea.sflag [#allocation9], %s511
          %s513 = sand.u32 %s189, 1
          %s514 = smul.addr %s513, 32
          %s515 = scalar_lea.vmem [#allocation10], %s514
          %517 = dma.done %s512, 512
        $region68: #{tpu_custom_call.1} parent=55 // pred_fallthru
          _
      $region56: #{tpu_custom_call.1} parent=5 // pred_fallthru
        _
    $region6: #{tpu_custom_call.1} parent=1 // loop_footer
      %s26 = sadd.s32 1, %s22
    $region7: #{tpu_custom_call.1} parent=1 // loop_footer_branch
      %21 = sbr.rel target = $region3
    $region8: #{tpu_custom_call.1} parent=1 // loop_exit
      _
    %518 = vsyncpa [#allocation3], 1
    %s519 = scalar_lea.sflag [#allocation3], 1
    %520 = vsyncpa %s519, 1
    %521 = vsyncpa [#allocation6], 1
    %522 = vsyncpa [#allocation4], 1
    %s523 = scalar_lea.sflag [#allocation4], 1
    %524 = vsyncpa %s523, 1
    %525 = vsyncpa [#allocation9], 1
    %s526 = scalar_lea.sflag [#allocation9], 1
    %527 = vsyncpa %s526, 1

</llo_original>
